<compile_context>
chip_gen: v5e
topology: v5e:2x2
jax: 0.10.0
libtpu: 0.0.40
codegen_flags: <defaults>
</compile_context>

<pallas_src>
import jax
import jax.numpy as jnp
from jax.experimental import pallas as pl
from jax.experimental.pallas import tpu as pltpu


def _round_up(x, m):
    return ((x + m - 1) // m) * m


def _sav_kernel(obs_ref, act_ref, w1o_ref, w1a_ref, b1_ref, w2_ref, b2_ref,
                wv_ref, bv_ref, out_ref):
    """Fused MLP + value head for one batch tile.

    obs_ref: (TB, OBS)   act_ref: (TB, ACT)
    w1o_ref: (OBS, H)    w1a_ref: (ACT, H)   b1_ref: (1, H)
    w2_ref:  (H, H)      b2_ref:  (1, H)
    wv_ref:  (1, H)      bv_ref:  (1, 1)
    out_ref: (1, TB)   -- lane-dense value row for this tile
    """
    # Layer 1: split-weight matmul == concat([obs, act], -1) @ W1  (no HBM concat).
    h = (jnp.dot(obs_ref[...], w1o_ref[...], preferred_element_type=jnp.float32)
         + jnp.dot(act_ref[...], w1a_ref[...], preferred_element_type=jnp.float32)
         + b1_ref[...])
    h = jnp.maximum(h, 0.0)                                   # f32 elementwise

    # Layer 2 (cast activations to the weight streaming dtype; accumulate f32).
    h = jnp.dot(h.astype(w2_ref.dtype), w2_ref[...],
                preferred_element_type=jnp.float32) + b2_ref[...]
    h = jnp.maximum(h, 0.0)

    # Value head: contract H on both operands -> (1, TB) lane-dense row
    # (avoids a lane-width-1 masked-store output).
    v = jax.lax.dot_general(wv_ref[...], h, (((1,), (1,)), ((), ())),
                            preferred_element_type=jnp.float32)
    out_ref[...] = (v + bv_ref[...]).astype(out_ref.dtype)


def state_action_value(observations, actions, params, *,
                       compute_dtype=jnp.float32, block_b=1024):
    """concat (fused into split-W1) -> 2-layer ReLU MLP -> value head -> (B,)."""
    w1, b1, w2, b2, wv, bv = params
    B, obs_dim = observations.shape
    act_dim = actions.shape[-1]
    d_in = obs_dim + act_dim
    assert w1.shape[0] == d_in
    H = w1.shape[1]

    # ---- batch tile selection --------------------------------------------
    block_b = _round_up(block_b, 128)          # lane-dense out blocks need %128
    if B <= block_b:
        TB = _round_up(max(B, 8), 8)           # single tile: block == full array
    else:
        TB = block_b
    B_pad = _round_up(B, TB)
    n_tiles = B_pad // TB

    obs = observations
    act = actions
    if B_pad != B:
        obs = jnp.pad(obs, ((0, B_pad - B), (0, 0)))
        act = jnp.pad(act, ((0, B_pad - B), (0, 0)))
    obs = obs.astype(compute_dtype)
    act = act.astype(compute_dtype)

    # Split W1 so concat([obs, act]) never materializes in HBM; biases stay f32.
    w1o = w1[:obs_dim].astype(compute_dtype)
    w1a = w1[obs_dim:].astype(compute_dtype)
    w2c = w2.astype(compute_dtype)
    b1r = b1.reshape(1, H).astype(jnp.float32)
    b2r = b2.reshape(1, H).astype(jnp.float32)
    wvr = wv.reshape(1, H).astype(jnp.float32)
    bvr = bv.reshape(1, 1).astype(jnp.float32)

    itemsize = jnp.dtype(compute_dtype).itemsize
    cost = pl.CostEstimate(
        flops=2 * B_pad * (d_in * H + H * H + H),
        transcendentals=0,
        bytes_accessed=(B_pad * d_in * itemsize          # input stream
                        + (d_in * H + H * H) * itemsize  # weights
                        + (3 * H + 1) * 4                # biases + value row
                        + B_pad * 4),                    # output
    )

    def resident(shape):  # weights/biases: constant index_map -> stay in VMEM
        return pl.BlockSpec(shape, lambda i: (0,) * len(shape))

    out = pl.pallas_call(
        _sav_kernel,
        out_shape=jax.ShapeDtypeStruct((1, B_pad), jnp.float32),
        grid=(n_tiles,),
        in_specs=[
            pl.BlockSpec((TB, obs_dim), lambda i: (i, 0)),   # obs tile
            pl.BlockSpec((TB, act_dim), lambda i: (i, 0)),   # act tile
            resident((obs_dim, H)),                          # W1_obs
            resident((act_dim, H)),                          # W1_act
            resident((1, H)),                                # b1
            resident((H, H)),                                # W2
            resident((1, H)),                                # b2
            resident((1, H)),                                # wv (row)
            resident((1, 1)),                                # bv
        ],
        out_specs=pl.BlockSpec((1, TB), lambda i: (0, i)),   # lane-dense slab
        compiler_params=pltpu.CompilerParams(
            dimension_semantics=("parallel",)),              # 2x on v7x megacore
        cost_estimate=cost,
    )(obs, act, w1o, w1a, b1r, w2c, b2r, wvr, bvr)

    return out[0, :B]                                        # squeeze(-1) + unpad


def init_params(key, obs_dim, act_dim, hidden):
    """Deterministic PyTorch-Linear-style init (uniform +/- 1/sqrt(fan_in))."""
    d_in = obs_dim + act_dim
    ks = jax.random.split(key, 6)

    def lin(kw, kb, fan_in, fan_out):
        bound = 1.0 / jnp.sqrt(fan_in)
        w = jax.random.uniform(kw, (fan_in, fan_out), jnp.float32, -bound, bound)
        b = jax.random.uniform(kb, (1, fan_out), jnp.float32, -bound, bound)
        return w, b

    w1, b1 = lin(ks[0], ks[1], d_in, hidden)     # base_cls layer 1
    w2, b2 = lin(ks[2], ks[3], hidden, hidden)   # base_cls layer 2
    wv, bv = lin(ks[4], ks[5], hidden, 1)        # self._value = nn.Linear(hidden, 1)
    return (w1, b1, w2, b2, wv, bv)


def _reference(observations, actions, params):
    w1, b1, w2, b2, wv, bv = params
    x = jnp.concatenate([observations, actions], axis=-1)
    h = jnp.maximum(x @ w1 + b1, 0.0)
    h = jnp.maximum(h @ w2 + b2, 0.0)
    return jnp.squeeze(h @ wv + bv, axis=-1)


if __name__ == "__main__":
    # Small shapes consistent with the forward: batch=8, obs=16, act=16, hidden=32.
    B, OBS, ACT, H = 8, 16, 16, 32

    key = jax.random.PRNGKey(0)
    k_obs, k_act, k_par, k_obs2, k_act2 = jax.random.split(key, 5)
    observations = jax.random.normal(k_obs, (B, OBS), jnp.float32)
    actions = jax.random.normal(k_act, (B, ACT), jnp.float32)
    params = init_params(k_par, OBS, ACT, H)

    # f32 path, single tile.
    out = state_action_value(observations, actions, params)
    jax.block_until_ready(out)
    ref = _reference(observations, actions, params)
    assert out.shape == (B,), out.shape
    assert jnp.allclose(out, ref, atol=1e-5, rtol=1e-5)

    # Multi-tile + padded batch path (B=300, tile=128 -> grid of 3, 84 pad rows).
    B2 = 300
    obs2 = jax.random.normal(k_obs2, (B2, OBS), jnp.float32)
    act2 = jax.random.normal(k_act2, (B2, ACT), jnp.float32)
    out2 = state_action_value(obs2, act2, params, block_b=128)
    jax.block_until_ready(out2)
    ref2 = _reference(obs2, act2, params)
    assert out2.shape == (B2,), out2.shape
    assert jnp.allclose(out2, ref2, atol=1e-5, rtol=1e-5)

    # bf16 streaming option (halves HBM read traffic; accumulation stays f32).
    out_bf16 = state_action_value(observations, actions, params,
                                  compute_dtype=jnp.bfloat16)
    jax.block_until_ready(out_bf16)
    assert jnp.allclose(out_bf16, ref, atol=5e-2, rtol=5e-2)

    print("KERNEL_OK")
</pallas_src>

<mosaic_0001>
module attributes {stable_mosaic.version = 11 : i64} {
  func.func @_sav_kernel(%arg0: i32, %arg1: memref<8x16xf32, #tpu.memory_space<vmem>>, %arg2: memref<8x16xf32, #tpu.memory_space<vmem>>, %arg3: memref<16x32xf32, #tpu.memory_space<vmem>>, %arg4: memref<16x32xf32, #tpu.memory_space<vmem>>, %arg5: memref<1x32xf32, #tpu.memory_space<vmem>>, %arg6: memref<32x32xf32, #tpu.memory_space<vmem>>, %arg7: memref<1x32xf32, #tpu.memory_space<vmem>>, %arg8: memref<1x32xf32, #tpu.memory_space<vmem>>, %arg9: memref<1x1xf32, #tpu.memory_space<vmem>>, %arg10: memref<1x8xf32, #tpu.memory_space<vmem>>) attributes {dimension_semantics = [#tpu.dimension_semantics<parallel>], iteration_bounds = array<i64: 1>, scalar_prefetch = 0 : i64, scratch_operands = 0 : i64, tpu.core_type = #tpu.core_type<tc>, window_params = [{transform_indices = @transform_0, window_bounds = array<i64: 8, 16>}, {transform_indices = @transform_1, window_bounds = array<i64: 8, 16>}, {pipeline_mode = #tpu.pipeline_mode<synchronous>, transform_indices = @transform_2, window_bounds = array<i64: 16, 32>}, {pipeline_mode = #tpu.pipeline_mode<synchronous>, transform_indices = @transform_3, window_bounds = array<i64: 16, 32>}, {pipeline_mode = #tpu.pipeline_mode<synchronous>, transform_indices = @transform_4, window_bounds = array<i64: 1, 32>}, {pipeline_mode = #tpu.pipeline_mode<synchronous>, transform_indices = @transform_5, window_bounds = array<i64: 32, 32>}, {pipeline_mode = #tpu.pipeline_mode<synchronous>, transform_indices = @transform_6, window_bounds = array<i64: 1, 32>}, {pipeline_mode = #tpu.pipeline_mode<synchronous>, transform_indices = @transform_7, window_bounds = array<i64: 1, 32>}, {pipeline_mode = #tpu.pipeline_mode<synchronous>, transform_indices = @transform_8, window_bounds = array<i64: 1, 1>}, {transform_indices = @transform_9, window_bounds = array<i64: 1, 8>}]} {
    %c0 = arith.constant 0 : index
    %c0_0 = arith.constant 0 : index
    %0 = vector.load %arg1[%c0, %c0_0] : memref<8x16xf32, #tpu.memory_space<vmem>>, vector<8x16xf32>
    %c0_1 = arith.constant 0 : index
    %c0_2 = arith.constant 0 : index
    %1 = vector.load %arg3[%c0_1, %c0_2] : memref<16x32xf32, #tpu.memory_space<vmem>>, vector<16x32xf32>
    %cst = arith.constant dense<0.000000e+00> : vector<8x32xf32>
    %2 = tpu.matmul %0, %1, %cst {dimension_numbers = #tpu.dot_dimension_numbers<[1], [0], [0], [1], [0, 0, 1, 1], [], []>} : vector<8x16xf32>, vector<16x32xf32>, vector<8x32xf32> -> vector<8x32xf32>
    %c0_3 = arith.constant 0 : index
    %c0_4 = arith.constant 0 : index
    %3 = vector.load %arg2[%c0_3, %c0_4] : memref<8x16xf32, #tpu.memory_space<vmem>>, vector<8x16xf32>
    %c0_5 = arith.constant 0 : index
    %c0_6 = arith.constant 0 : index
    %4 = vector.load %arg4[%c0_5, %c0_6] : memref<16x32xf32, #tpu.memory_space<vmem>>, vector<16x32xf32>
    %cst_7 = arith.constant dense<0.000000e+00> : vector<8x32xf32>
    %5 = tpu.matmul %3, %4, %cst_7 {dimension_numbers = #tpu.dot_dimension_numbers<[1], [0], [0], [1], [0, 0, 1, 1], [], []>} : vector<8x16xf32>, vector<16x32xf32>, vector<8x32xf32> -> vector<8x32xf32>
    %6 = arith.addf %2, %5 : vector<8x32xf32>
    %c0_8 = arith.constant 0 : index
    %c0_9 = arith.constant 0 : index
    %7 = vector.load %arg5[%c0_8, %c0_9] : memref<1x32xf32, #tpu.memory_space<vmem>>, vector<1x32xf32>
    %8 = vector.broadcast %7 : vector<1x32xf32> to vector<8x32xf32>
    %9 = arith.addf %6, %8 : vector<8x32xf32>
    %cst_10 = arith.constant 0.000000e+00 : f32
    %10 = vector.broadcast %cst_10 : f32 to vector<8x32xf32>
    %11 = arith.maximumf %9, %10 : vector<8x32xf32>
    %c0_11 = arith.constant 0 : index
    %c0_12 = arith.constant 0 : index
    %12 = vector.load %arg6[%c0_11, %c0_12] : memref<32x32xf32, #tpu.memory_space<vmem>>, vector<32x32xf32>
    %cst_13 = arith.constant dense<0.000000e+00> : vector<8x32xf32>
    %13 = tpu.matmul %11, %12, %cst_13 {dimension_numbers = #tpu.dot_dimension_numbers<[1], [0], [0], [1], [0, 0, 1, 1], [], []>} : vector<8x32xf32>, vector<32x32xf32>, vector<8x32xf32> -> vector<8x32xf32>
    %c0_14 = arith.constant 0 : index
    %c0_15 = arith.constant 0 : index
    %14 = vector.load %arg7[%c0_14, %c0_15] : memref<1x32xf32, #tpu.memory_space<vmem>>, vector<1x32xf32>
    %15 = vector.broadcast %14 : vector<1x32xf32> to vector<8x32xf32>
    %16 = arith.addf %13, %15 : vector<8x32xf32>
    %cst_16 = arith.constant 0.000000e+00 : f32
    %17 = vector.broadcast %cst_16 : f32 to vector<8x32xf32>
    %18 = arith.maximumf %16, %17 : vector<8x32xf32>
    %c0_17 = arith.constant 0 : index
    %c0_18 = arith.constant 0 : index
    %19 = vector.load %arg8[%c0_17, %c0_18] : memref<1x32xf32, #tpu.memory_space<vmem>>, vector<1x32xf32>
    %cst_19 = arith.constant dense<0.000000e+00> : vector<1x8xf32>
    %20 = tpu.matmul %19, %18, %cst_19 {dimension_numbers = #tpu.dot_dimension_numbers<[1], [1], [0], [0], [0, 0, 1, 0], [], []>} : vector<1x32xf32>, vector<8x32xf32>, vector<1x8xf32> -> vector<1x8xf32>
    %c0_20 = arith.constant 0 : index
    %c0_21 = arith.constant 0 : index
    %21 = vector.load %arg9[%c0_20, %c0_21] : memref<1x1xf32, #tpu.memory_space<vmem>>, vector<1x1xf32>
    %22 = vector.broadcast %21 : vector<1x1xf32> to vector<1x8xf32>
    %23 = arith.addf %20, %22 : vector<1x8xf32>
    %c0_22 = arith.constant 0 : index
    %c0_23 = arith.constant 0 : index
    %24 = vector.load %arg10[%c0_22, %c0_23] : memref<1x8xf32, #tpu.memory_space<vmem>>, vector<1x8xf32>
    tpu.vector_store %arg10[%c0_22, %c0_23], %23 {strides = array<i32>} : memref<1x8xf32, #tpu.memory_space<vmem>>, vector<1x8xf32>,
    return
  }
  func.func @transform_0(%arg0: i32) -> (i32, i32) {
    %c0_i32 = arith.constant 0 : i32
    %c0_i32_0 = arith.constant 0 : i32
    return %arg0, %c0_i32 : i32, i32
  }
  func.func @transform_1(%arg0: i32) -> (i32, i32) {
    %c0_i32 = arith.constant 0 : i32
    %c0_i32_0 = arith.constant 0 : i32
    return %arg0, %c0_i32 : i32, i32
  }
  func.func @transform_2(%arg0: i32) -> (i32, i32) {
    %c0_i32 = arith.constant 0 : i32
    %c0_i32_0 = arith.constant 0 : i32
    %c0_i32_1 = arith.constant 0 : i32
    return %c0_i32, %c0_i32_0 : i32, i32
  }
  func.func @transform_3(%arg0: i32) -> (i32, i32) {
    %c0_i32 = arith.constant 0 : i32
    %c0_i32_0 = arith.constant 0 : i32
    %c0_i32_1 = arith.constant 0 : i32
    return %c0_i32, %c0_i32_0 : i32, i32
  }
  func.func @transform_4(%arg0: i32) -> (i32, i32) {
    %c0_i32 = arith.constant 0 : i32
    %c0_i32_0 = arith.constant 0 : i32
    %c0_i32_1 = arith.constant 0 : i32
    return %c0_i32, %c0_i32_0 : i32, i32
  }
  func.func @transform_5(%arg0: i32) -> (i32, i32) {
    %c0_i32 = arith.constant 0 : i32
    %c0_i32_0 = arith.constant 0 : i32
    %c0_i32_1 = arith.constant 0 : i32
    return %c0_i32, %c0_i32_0 : i32, i32
  }
  func.func @transform_6(%arg0: i32) -> (i32, i32) {
    %c0_i32 = arith.constant 0 : i32
    %c0_i32_0 = arith.constant 0 : i32
    %c0_i32_1 = arith.constant 0 : i32
    return %c0_i32, %c0_i32_0 : i32, i32
  }
  func.func @transform_7(%arg0: i32) -> (i32, i32) {
    %c0_i32 = arith.constant 0 : i32
    %c0_i32_0 = arith.constant 0 : i32
    %c0_i32_1 = arith.constant 0 : i32
    return %c0_i32, %c0_i32_0 : i32, i32
  }
  func.func @transform_8(%arg0: i32) -> (i32, i32) {
    %c0_i32 = arith.constant 0 : i32
    %c0_i32_0 = arith.constant 0 : i32
    %c0_i32_1 = arith.constant 0 : i32
    return %c0_i32, %c0_i32_0 : i32, i32
  }
  func.func @transform_9(%arg0: i32) -> (i32, i32) {
    %c0_i32 = arith.constant 0 : i32
    %c0_i32_0 = arith.constant 0 : i32
    return %c0_i32, %arg0 : i32, i32
  }
}

</mosaic_0001>

<llo_original>
// kernel: tpu_custom_call.1
$region0: #{tpu_custom_call.1}
  #allocation0 [shape = 'u32[]', space=smem, size = 0x4, offset = 0x4, fixed_abs, tag = 'smem constant byte address 0x4 - core index']
  #allocation1 [shape = 'u32[72,128]{1,0:T(1,128)}', space=vmem, size = 0x9000, scoped, tag = 'internal scratch']
  #allocation2 [shape = 'f32[1,1]{1,0:T(1,128)S(1)}', space=vmem, size = 0x200, scoped, tag = 'scoped memory for tpu_custom_call.1']
  %s0 = inlined_call_operand.hbm [shape: f32[8,16], index: 0, kind: input, shape index: {}]
  %s1 = inlined_call_operand.hbm [shape: f32[8,16], index: 1, kind: input, shape index: {}]
  %s2 = inlined_call_operand.hbm [shape: f32[16,32], index: 2, kind: input, shape index: {}]
  %s3 = inlined_call_operand.hbm [shape: f32[16,32], index: 3, kind: input, shape index: {}]
  %s4 = inlined_call_operand.vmem [shape: f32[1,32], index: 4, kind: input, shape index: {}]
  %s5 = inlined_call_operand.hbm [shape: f32[32,32], index: 5, kind: input, shape index: {}]
  %s6 = inlined_call_operand.vmem [shape: f32[1,32], index: 6, kind: input, shape index: {}]
  %s7 = inlined_call_operand.vmem [shape: f32[1,32], index: 7, kind: input, shape index: {}]
  %s8 = inlined_call_operand.<no memory space> [shape: f32[1,1], index: 8, kind: input, shape index: {}]
  %s9 = inlined_call_operand.hbm [shape: f32[1,8], index: 9, kind: output, shape index: {}]
  %s10 = sld [smem:[#allocation0]]
  $region66: #{tpu_custom_call.1} parent=0
    _
  %s12 = ssub.s32 1, %s10
  %s13 = scalar_select 0, %s12, %s10
  %v14 = vstv %s8
  %15 = vst [vmem:[#allocation2] sm:$0x1] %v14
  $region1: #{tpu_custom_call.1} parent=0
    #allocation3 [shape = 'u8[4096]{0}', space=vmem, size = 0x1000, scoped, tag = 'input window, operand 0, single buffered']
    #allocation4 [shape = 's32[1]{0}', space=sflag, size = 0x4, scoped, tag = 'scoped memory for tpu_custom_call.1']
    #allocation5 [shape = 's32[1]{0}', space=sflag, size = 0x4, scoped, tag = 'scoped memory for tpu_custom_call.1']
    #allocation6 [shape = 'u8[4096]{0}', space=vmem, size = 0x1000, scoped, tag = 'input window, operand 1, single buffered']
    #allocation7 [shape = 's32[1]{0}', space=sflag, size = 0x4, scoped, tag = 'scoped memory for tpu_custom_call.1']
    #allocation8 [shape = 'u8[8192]{0}', space=vmem, size = 0x2000, scoped, tag = 'input window, operand 2, single buffered']
    #allocation9 [shape = 'u8[8192]{0}', space=vmem, size = 0x2000, scoped, tag = 'input window, operand 3, single buffered']
    #allocation10 [shape = 's32[1]{0}', space=sflag, size = 0x4, scoped, tag = 'scoped memory for tpu_custom_call.1']
    #allocation11 [shape = 'u8[16384]{0}', space=vmem, size = 0x4000, scoped, tag = 'input window, operand 5, single buffered']
    #allocation12 [shape = 'u8[512]{0}', space=vmem, size = 0x400, scoped, tag = 'output window, operand 0, single buffered']
    %16 = vsyncpa [#allocation4], 0
    %17 = vsyncpa [#allocation7], 0
    %18 = vsyncpa [#allocation10], 0
    %19 = vsyncpa [#allocation5], 0
    // Predicated region
    $region2: #{tpu_custom_call.1} parent=1 // pred_check
      _
    $region3: #{tpu_custom_call.1} parent=1 // pred_check_branch
      %21 = sbr.rel (0) target = $region5
    $region4: #{tpu_custom_call.1} parent=1 // pred_region
      %23 = vsyncadd [#allocation4], 0
      %s25 = sshll.u32 %s0, 4
      %s26 = int_to_ptr.hbm [resolvable:$true] %s25
      %s27 = sshll.u32 [#allocation3], 4
      %s28 = int_to_ptr.vmem [resolvable:$true] %s27
      %30 = dma.hbm_to_vmem [thread:$0]  %s26, 128, %s28, [#allocation4]
    $region5: #{tpu_custom_call.1} parent=1 // pred_fallthru
      _
    // Predicated region
    $region6: #{tpu_custom_call.1} parent=1 // pred_check
      _
    $region7: #{tpu_custom_call.1} parent=1 // pred_check_branch
      %32 = sbr.rel (0) target = $region9
    $region8: #{tpu_custom_call.1} parent=1 // pred_region
      %34 = vsyncadd [#allocation7], 0
      %s36 = sshll.u32 %s1, 4
      %s37 = int_to_ptr.hbm [resolvable:$true] %s36
      %s38 = sshll.u32 [#allocation6], 4
      %s39 = int_to_ptr.vmem [resolvable:$true] %s38
      %41 = dma.hbm_to_vmem [thread:$0]  %s37, 128, %s39, [#allocation7]
    $region9: #{tpu_custom_call.1} parent=1 // pred_fallthru
      _
    // Predicated region
    $region10: #{tpu_custom_call.1} parent=1 // pred_check
      _
    $region11: #{tpu_custom_call.1} parent=1 // pred_check_branch
      %43 = sbr.rel (0) target = $region13
    $region12: #{tpu_custom_call.1} parent=1 // pred_region
      %45 = vsyncadd [#allocation7], 0
      %s46 = sshll.u32 %s2, 4
      %s47 = int_to_ptr.hbm [resolvable:$true] %s46
      %s48 = sshll.u32 [#allocation8], 4
      %s49 = int_to_ptr.vmem [resolvable:$true] %s48
      %54 = dma.hbm_to_vmem [thread:$0]  %s47, 256, %s49, [#allocation7], 128, 128, 8
    $region13: #{tpu_custom_call.1} parent=1 // pred_fallthru
      _
    // Predicated region
    $region14: #{tpu_custom_call.1} parent=1 // pred_check
      _
    $region15: #{tpu_custom_call.1} parent=1 // pred_check_branch
      %56 = sbr.rel (0) target = $region17
    $region16: #{tpu_custom_call.1} parent=1 // pred_region
      %58 = vsyncadd [#allocation10], 0
      %s59 = sshll.u32 %s3, 4
      %s60 = int_to_ptr.hbm [resolvable:$true] %s59
      %s61 = sshll.u32 [#allocation9], 4
      %s62 = int_to_ptr.vmem [resolvable:$true] %s61
      %67 = dma.hbm_to_vmem [thread:$0]  %s60, 256, %s62, [#allocation10], 128, 128, 8
    $region17: #{tpu_custom_call.1} parent=1 // pred_fallthru
      _
    // Predicated region
    $region18: #{tpu_custom_call.1} parent=1 // pred_check
      _
    $region19: #{tpu_custom_call.1} parent=1 // pred_check_branch
      %69 = sbr.rel (0) target = $region21
    $region20: #{tpu_custom_call.1} parent=1 // pred_region
      _
    $region21: #{tpu_custom_call.1} parent=1 // pred_fallthru
      _
    // Predicated region
    $region22: #{tpu_custom_call.1} parent=1 // pred_check
      _
    $region23: #{tpu_custom_call.1} parent=1 // pred_check_branch
      %71 = sbr.rel (0) target = $region25
    $region24: #{tpu_custom_call.1} parent=1 // pred_region
      %73 = vsyncadd [#allocation10], 0
      %s74 = sshll.u32 %s5, 4
      %s75 = int_to_ptr.hbm [resolvable:$true] %s74
      %s76 = sshll.u32 [#allocation11], 4
      %s77 = int_to_ptr.vmem [resolvable:$true] %s76
      %82 = dma.hbm_to_vmem [thread:$0]  %s75, 512, %s77, [#allocation10], 128, 128, 8
    $region25: #{tpu_custom_call.1} parent=1 // pred_fallthru
      _
    // Predicated region
    $region26: #{tpu_custom_call.1} parent=1 // pred_check
      _
    $region27: #{tpu_custom_call.1} parent=1 // pred_check_branch
      %84 = sbr.rel (0) target = $region29
    $region28: #{tpu_custom_call.1} parent=1 // pred_region
      _
    $region29: #{tpu_custom_call.1} parent=1 // pred_fallthru
      _
    // Predicated region
    $region30: #{tpu_custom_call.1} parent=1 // pred_check
      _
    $region31: #{tpu_custom_call.1} parent=1 // pred_check_branch
      %86 = sbr.rel (0) target = $region33
    $region32: #{tpu_custom_call.1} parent=1 // pred_region
      _
    $region33: #{tpu_custom_call.1} parent=1 // pred_fallthru
      _
    // Predicated region
    $region34: #{tpu_custom_call.1} parent=1 // pred_check
      _
    $region35: #{tpu_custom_call.1} parent=1 // pred_check_branch
      %88 = sbr.rel (0) target = $region37
    $region36: #{tpu_custom_call.1} parent=1 // pred_region
      _
    $region37: #{tpu_custom_call.1} parent=1 // pred_fallthru
      _
    // Predicated region
    $region38: #{tpu_custom_call.1} parent=1 // pred_check
      _
    $region39: #{tpu_custom_call.1} parent=1 // pred_check_branch
      %90 = sbr.rel (0) target = $region41
    $region40: #{tpu_custom_call.1} parent=1 // pred_region
      %92 = dma.done [#allocation4], 128
    $region41: #{tpu_custom_call.1} parent=1 // pred_fallthru
      _
    // Predicated region
    $region42: #{tpu_custom_call.1} parent=1 // pred_check
      _
    $region43: #{tpu_custom_call.1} parent=1 // pred_check_branch
      %94 = sbr.rel (0) target = $region45
    $region44: #{tpu_custom_call.1} parent=1 // pred_region
      %96 = dma.done [#allocation7], 128
    $region45: #{tpu_custom_call.1} parent=1 // pred_fallthru
      _
    // Predicated region
    $region46: #{tpu_custom_call.1} parent=1 // pred_check
      _
    $region47: #{tpu_custom_call.1} parent=1 // pred_check_branch
      %98 = sbr.rel (0) target = $region49
    $region48: #{tpu_custom_call.1} parent=1 // pred_region
      %100 = dma.done [#allocation7], 256
    $region49: #{tpu_custom_call.1} parent=1 // pred_fallthru
      _
    // Predicated region
    $region50: #{tpu_custom_call.1} parent=1 // pred_check
      _
    $region51: #{tpu_custom_call.1} parent=1 // pred_check_branch
      %102 = sbr.rel (0) target = $region53
    $region52: #{tpu_custom_call.1} parent=1 // pred_region
      %104 = dma.done [#allocation10], 256
    $region53: #{tpu_custom_call.1} parent=1 // pred_fallthru
      _
    // Predicated region
    $region54: #{tpu_custom_call.1} parent=1 // pred_check
      _
    $region55: #{tpu_custom_call.1} parent=1 // pred_check_branch
      %106 = sbr.rel (0) target = $region57
    $region56: #{tpu_custom_call.1} parent=1 // pred_region
      %108 = dma.done [#allocation10], 512
    $region57: #{tpu_custom_call.1} parent=1 // pred_fallthru
      _
    %v109 = vld [vmem:[#allocation3] sm:$0xff]
    %v110 = vld [vmem:[#allocation8] sm:$0xff]
    %v111 = vld [vmem:[#allocation8 + $0x8] sm:$0xff]
    %v112 = vld [vmem:[#allocation6] sm:$0xff]
    %v113 = vld [vmem:[#allocation9] sm:$0xff]
    %v114 = vld [vmem:[#allocation9 + $0x8] sm:$0xff]
    %vm115 = vcmask 130048
    %v117 = vsel %vm115, %v112, 0
    %119 = vmatpush.msra.mxu0 0.0
    %120 = vmatpush.msra.mxu0 0.0
    %121 = vmatpush.msra.mxu0 0.0
    %122 = vmatpush.msra.mxu0 0.0
    %123 = vmatpush.msra.mxu0 0.0
    %124 = vmatpush.msra.mxu0 0.0
    %125 = vmatpush.msra.mxu0 0.0
    %126 = vmatpush.msra.mxu0 0.0
    %127 = vmatpush.msra.mxu0 0.0
    %128 = vmatpush.msra.mxu0 0.0
    %129 = vmatpush.msra.mxu0 0.0
    %130 = vmatpush.msra.mxu0 0.0
    %131 = vmatpush.msra.mxu0 0.0
    %132 = vmatpush.msra.mxu0 0.0
    %133 = vmatpush.msra.mxu0 %v114
    %134 = vmatpush.msra.mxu0 %v113
    %135 = vmatmul.f32.gmra.mxu0 %v117
    %v136 = vpop.f32.mrf.mxu0
    %v137 = vadd.f32 0.0, %v136
    %138 = vdwg.mxu0
    %v140 = vsel %vm115, %v109, 0
    %142 = vmatpush.msra.mxu0 0.0
    %143 = vmatpush.msra.mxu0 0.0
    %144 = vmatpush.msra.mxu0 0.0
    %145 = vmatpush.msra.mxu0 0.0
    %146 = vmatpush.msra.mxu0 0.0
    %147 = vmatpush.msra.mxu0 0.0
    %148 = vmatpush.msra.mxu0 0.0
    %149 = vmatpush.msra.mxu0 0.0
    %150 = vmatpush.msra.mxu0 0.0
    %151 = vmatpush.msra.mxu0 0.0
    %152 = vmatpush.msra.mxu0 0.0
    %153 = vmatpush.msra.mxu0 0.0
    %154 = vmatpush.msra.mxu0 0.0
    %155 = vmatpush.msra.mxu0 0.0
    %156 = vmatpush.msra.mxu0 %v111
    %157 = vmatpush.msra.mxu0 %v110
    %158 = vmatmul.f32.gmra.mxu0 %v140
    %v159 = vpop.f32.mrf.mxu0
    %v160 = vadd.f32 %v137, %v159
    %161 = vdwg.mxu0
    %v162 = vld [vmem:[%s4] sm:$0x1]
    %v164 = vperm.slane %v162, 0
    %v166 = vadd.f32 %v160, %v164
    %v167 = vmax.f32 %v166, 0.0
    %v168 = vld [vmem:[#allocation11] sm:$0xff]
    %v169 = vld [vmem:[#allocation11 + $0x8] sm:$0xff]
    %v170 = vld [vmem:[#allocation11 + $0x10] sm:$0xff]
    %v171 = vld [vmem:[#allocation11 + $0x18] sm:$0xff]
    %v172 = vld [vmem:[%s6] sm:$0x1]
    %v174 = vperm.slane %v172, 0
    %vm176 = vcmask 261120
    %v178 = vsel %vm176, %v167, 0
    %180 = vmatpush.msra.mxu0 0.0
    %181 = vmatpush.msra.mxu0 0.0
    %182 = vmatpush.msra.mxu0 0.0
    %183 = vmatpush.msra.mxu0 0.0
    %184 = vmatpush.msra.mxu0 0.0
    %185 = vmatpush.msra.mxu0 0.0
    %186 = vmatpush.msra.mxu0 0.0
    %187 = vmatpush.msra.mxu0 0.0
    %188 = vmatpush.msra.mxu0 0.0
    %189 = vmatpush.msra.mxu0 0.0
    %190 = vmatpush.msra.mxu0 0.0
    %191 = vmatpush.msra.mxu0 0.0
    %192 = vmatpush.msra.mxu0 %v171
    %193 = vmatpush.msra.mxu0 %v170
    %194 = vmatpush.msra.mxu0 %v169
    %195 = vmatpush.msra.mxu0 %v168
    %196 = vmatmul.f32.gmra.mxu0 %v178
    %v197 = vpop.f32.mrf.mxu0
    %v198 = vadd.f32 %v174, %v197
    %199 = vdwg.mxu0
    %v200 = vmax.f32 %v198, 0.0
    %v201 = vld [vmem:[%s7] sm:$0x1]
    %v202 = vld [vmem:[#allocation2] sm:$0x1]
    %204 = vset.pattern.permute.xlu0 0
    %205 = vperm.xlu0 %204, %v202
    %v206 = vpop.permute.xlu0 %205
    %v208 = vperm.slane %v206, 0
    %v210 = vsel %vm176, %v201, 0
    %v213 = vsel %vm176, %v200, 0
    %215 = vmatpush.xpose.msra.mxu0 0.0
    %216 = vmatpush.xpose.msra.mxu0 0.0
    %217 = vmatpush.xpose.msra.mxu0 0.0
    %218 = vmatpush.xpose.msra.mxu0 0.0
    %219 = vmatpush.xpose.msra.mxu0 0.0
    %220 = vmatpush.xpose.msra.mxu0 0.0
    %221 = vmatpush.xpose.msra.mxu0 0.0
    %222 = vmatpush.xpose.msra.mxu0 0.0
    %223 = vmatpush.xpose.msra.mxu0 0.0
    %224 = vmatpush.xpose.msra.mxu0 0.0
    %225 = vmatpush.xpose.msra.mxu0 0.0
    %226 = vmatpush.xpose.msra.mxu0 0.0
    %227 = vmatpush.xpose.msra.mxu0 0.0
    %228 = vmatpush.xpose.msra.mxu0 0.0
    %229 = vmatpush.xpose.msra.mxu0 0.0
    %230 = vmatpush.xpose.msra.mxu0 %v213
    %231 = vmatmul.f32.gmra.mxu0 %v210
    %v232 = vpop.f32.mrf.mxu0
    %v233 = vadd.f32 %v208, %v232
    %234 = vdwg.mxu0
    %vm235 = vcmask 57344
    %236 = vst.msk [vmem:[#allocation12] sm:$0x1] %vm235, %v233
    // Predicated region
    $region58: #{tpu_custom_call.1} parent=1 // pred_check
      _
    $region59: #{tpu_custom_call.1} parent=1 // pred_check_branch
      %238 = sbr.rel (0) target = $region61
    $region60: #{tpu_custom_call.1} parent=1 // pred_region
      %240 = vsyncadd [#allocation5], 0
      %s242 = sshll.u32 [#allocation12], 4
      %s243 = int_to_ptr.vmem [resolvable:$true] %s242
      %s244 = sshll.u32 %s9, 4
      %s245 = int_to_ptr.hbm [resolvable:$true] %s244
      %247 = dma.vmem_to_hbm [thread:$0]  %s243, 16, %s245, [#allocation5]
    $region61: #{tpu_custom_call.1} parent=1 // pred_fallthru
      _
    // Predicated region
    $region62: #{tpu_custom_call.1} parent=1 // pred_check
      _
    $region63: #{tpu_custom_call.1} parent=1 // pred_check_branch
      %249 = sbr.rel (0) target = $region65
    $region64: #{tpu_custom_call.1} parent=1 // pred_region
      %251 = dma.done [#allocation5], 16
    $region65: #{tpu_custom_call.1} parent=1 // pred_fallthru
      _
    %252 = vsyncpa [#allocation4], 1
    %253 = vsyncpa [#allocation7], 1
    %254 = vsyncpa [#allocation10], 1
    %255 = vsyncpa [#allocation5], 1

</llo_original>
